<compile_context>
chip_gen: v6e
topology: v6e:2x2x1
jax: 0.10.0
libtpu: 0.0.40
codegen_flags: <defaults>
</compile_context>

<pallas_src>
import functools

import jax
import jax.numpy as jnp
from jax.experimental import pallas as pl
from jax.experimental.pallas import tpu as pltpu

_LANE = 128


def _round_up(x, m):
    return ((x + m - 1) // m) * m


def _vmem_capacity_bytes():
    """Physical VMEM per TensorCore; conservative 64 MiB (v7x) if unqueryable."""
    try:
        info = pltpu.get_tpu_info()
        cap = int(getattr(info, "vmem_capacity_bytes", 0) or 0)
        if cap > 0:
            return cap
    except Exception:
        # Trace-time hardware query failed (e.g. AOT off-device); be conservative.
        pass
    return 64 << 20


def mlp_kernel(x_ref, w1_ref, b1_ref, wh_ref, bh_ref, wp_ref, bp_ref, o_ref,
               *, hidden_matmul_dtype=None):
    # x_ref : (2, TB)      input tile, batch on lanes
    # w1_ref: (H, 2)       hidden1 weight, torch-native (out, in)   [bf16 on fast path]
    # b1_ref: (H, 1)       hidden1 bias (column, f32)
    # wh_ref: (L, H, H)    stacked hidden weights (out, in)         [bf16 on fast path]
    # bh_ref: (L, H, 1)    stacked hidden biases (columns, f32)
    # wp_ref: (H, 1)       predict weight stored as a column (f32)
    # bp_ref: (1, 1)       predict bias (f32)
    # o_ref : (1, TB)      output tile, batch on lanes (lane-dense, unmasked stores)
    x = x_ref[...]
    w1 = w1_ref[...]

    # hidden1 (K=2, no activation): two broadcast FMAs on the VPU; no MXU pass.
    # The row (x) / column (w1) broadcasts are issued once per grid step, outside the
    # layer loop, so they sit well below the tanh/matmul critical path.
    h = w1[:, 0:1] * x[0:1, :] + w1[:, 1:2] * x[1:2, :] + b1_ref[...]

    if hidden_matmul_dtype is not None:
        # Weights were pre-cast on the host; cast activations once here so every
        # hidden matmul runs natively in bf16 on the MXU (f32 accumulation below).
        h = h.astype(hidden_matmul_dtype)

    n_hidden = wh_ref.shape[0]            # static, small -> unrolled Python loop
    for i in range(n_hidden):
        # MXU matmul with N = TB (lane-dense); f32 accumulation; f32 bias add.
        z = jnp.dot(wh_ref[i], h, preferred_element_type=jnp.float32) + bh_ref[i]
        if hidden_matmul_dtype is not None:
            # Cast before tanh: for small H the single EUP is the binding unit and
            # packed bf16 roughly doubles its throughput on v6e/v7x; the next matmul
            # wants bf16 input anyway.  (Not used on v5e: keep dtype=None there.)
            z = z.astype(hidden_matmul_dtype)
        h = jnp.tanh(z)
    # Note: for very large H one would row-chunk this loop (<=256-row blocks) to keep
    # the (H, TB) working set near the vreg file; unnecessary at small/medium H.

    # predict (output width 1): elementwise multiply + sublane reduce (XLU), no MXU.
    # wp/bp stay f32 so the final reduction accumulates in f32 on both paths.
    out = jnp.sum(h * wp_ref[...], axis=0, keepdims=True) + bp_ref[...]
    o_ref[...] = out.astype(o_ref.dtype)


def approximation_net_forward_features_major(xt, params, *, batch_tile=4096,
                                             hidden_matmul_dtype=None):
    """xt: (2, B) features-major input -> (B, 1) output.

    Feeding features-major data avoids any host-side transpose pass: the kernel
    reads lane-dense (2, tb) batch tiles straight from HBM.  A pad pass is only
    emitted when B is not a multiple of the chosen batch tile.
    """
    w1, b1, wh, bh, wp, bp = params
    assert xt.shape[0] == 2, "expected features-major input of shape (2, B)"
    B = int(xt.shape[1])
    H = int(w1.shape[0])
    L = int(wh.shape[0])
    dtype = xt.dtype
    itemsize = jnp.dtype(dtype).itemsize
    w_itemsize = (jnp.dtype(hidden_matmul_dtype).itemsize
                  if hidden_matmul_dtype is not None else jnp.dtype(w1.dtype).itemsize)

    # ---- VMEM budget (generation-aware) ------------------------------------------
    vmem_cap = int(0.85 * _vmem_capacity_bytes())   # ~54 MiB on v7x, ~109 MiB on v5e/v6e
    weight_bytes = w_itemsize * (2 * H + L * H * H) + 4 * (H + L * H + H + 1)
    # Single-buffer the grid-invariant weight stack only when the second pipeline
    # buffer would actually cost meaningful VMEM (capability-gated, no blanket except).
    single_buffer_weights = weight_bytes > (4 << 20) and hasattr(pl, "Buffered")
    weight_bufs = 1 if single_buffer_weights else 2

    def est_vmem(tb):
        io = 2 * (2 * tb + tb) * itemsize           # double-buffered x + out tiles
        act = 4 * (H * tb * 4)                      # live f32 (H, tb) temporaries
        return weight_bufs * weight_bytes + io + act + (2 << 20)

    # ---- batch-tile selection ------------------------------------------------------
    # Large lane-aligned tiles amortize the ~0.35us/step pipeline overhead; keep >=2
    # grid tiles when the batch allows it so the "parallel" batch axis can be sharded
    # across v7x's two TensorCores; clamp by the VMEM estimate.
    B128 = _round_up(max(B, 1), _LANE)
    tb = _round_up(max(_LANE, min(int(batch_tile), B128)), _LANE)
    if B128 >= 2 * _LANE:
        tb = min(tb, _round_up(B128 // 2, _LANE))
    while tb > _LANE and est_vmem(tb) > vmem_cap:
        tb = _round_up(tb // 2, _LANE)
    grid_n = pl.cdiv(B, tb)
    B_pad = grid_n * tb

    # ---- host-side parameter layout (tiny, one-time passes over the weights) -------
    if hidden_matmul_dtype is not None:
        w1 = w1.astype(hidden_matmul_dtype)         # pre-cast once; no per-tile casts
        wh = wh.astype(hidden_matmul_dtype)
    b1c = b1.reshape(H, 1).astype(jnp.float32)
    bhc = bh.reshape(L, H, 1).astype(jnp.float32)
    wpc = wp.reshape(H, 1).astype(jnp.float32)
    bpc = bp.reshape(1, 1).astype(jnp.float32)

    if B_pad != B:
        # Only ragged batches pay this pad pass; tile-aligned batches go straight in.
        xt = jnp.pad(xt, ((0, 0), (0, B_pad - B)))

    cost = pl.CostEstimate(
        flops=int(2 * B_pad * H * (2 + L * H + 1)),
        transcendentals=int(B_pad * H * L),
        bytes_accessed=int(itemsize * 3 * B_pad + weight_bytes),
    )
    vmem_limit = int(min(max(est_vmem(tb), 32 << 20), vmem_cap))

    def wspec(shape):
        idx = lambda i: (0,) * len(shape)           # grid-invariant block
        if single_buffer_weights:
            return pl.BlockSpec(shape, idx, pipeline_mode=pl.Buffered(1))
        return pl.BlockSpec(shape, idx)

    fwd = pl.pallas_call(
        functools.partial(mlp_kernel, hidden_matmul_dtype=hidden_matmul_dtype),
        out_shape=jax.ShapeDtypeStruct((1, B_pad), dtype),
        grid_spec=pltpu.PrefetchScalarGridSpec(
            num_scalar_prefetch=0,
            grid=(grid_n,),
            in_specs=[
                pl.BlockSpec((2, tb), lambda i: (0, i)),   # x tile, batch on lanes
                wspec((H, 2)),                             # hidden1 W
                wspec((H, 1)),                             # hidden1 b
                wspec((L, H, H)),                          # hidden W stack
                wspec((L, H, 1)),                          # hidden b stack
                wspec((H, 1)),                             # predict W (column)
                wspec((1, 1)),                             # predict b
            ],
            out_specs=pl.BlockSpec((1, tb), lambda i: (0, i)),
        ),
        compiler_params=pltpu.CompilerParams(
            dimension_semantics=("parallel",),
            vmem_limit_bytes=vmem_limit,
        ),
        cost_estimate=cost,
    )
    out_t = fwd(xt, w1, b1c, wh, bhc, wpc, bpc)     # (1, B_pad), lane-dense stores
    return out_t[:, :B].reshape(B, 1)


def approximation_net_forward(x, params, *, batch_tile=4096, hidden_matmul_dtype=None):
    """x: (B, 2) (torch layout) -> (B, 1).

    This entry transposes x to the features-major (2, B) layout the kernel wants; the
    transpose (+ pad, when needed) fuses into a single XLA pass over x (~8 B/sample).
    Callers that can produce features-major data should use
    `approximation_net_forward_features_major` and skip that pass entirely.
    """
    return approximation_net_forward_features_major(
        x.T, params, batch_tile=batch_tile, hidden_matmul_dtype=hidden_matmul_dtype)


def init_params(key, n_hidden_layers, n_neurons_per_layer, dtype=jnp.float32):
    """Deterministic synthetic parameters in torch-native nn.Linear shapes."""
    H, L = n_neurons_per_layer, n_hidden_layers
    ks = jax.random.split(key, 6)
    w1 = jax.random.normal(ks[0], (H, 2), dtype) * (1.0 / jnp.sqrt(2.0))
    b1 = jax.random.normal(ks[1], (H,), dtype) * 0.1
    wh = jax.random.normal(ks[2], (L, H, H), dtype) * (1.0 / jnp.sqrt(H))
    bh = jax.random.normal(ks[3], (L, H), dtype) * 0.1
    wp = jax.random.normal(ks[4], (1, H), dtype) * (1.0 / jnp.sqrt(H))
    bp = jax.random.normal(ks[5], (1,), dtype) * 0.1
    return (w1, b1, wh, bh, wp, bp)


def reference_forward(x, params):
    """Pure-JAX reference mirroring the PyTorch forward exactly (x: (B, 2))."""
    w1, b1, wh, bh, wp, bp = params
    h = x @ w1.T + b1                        # hidden1 (no activation)
    for i in range(wh.shape[0]):
        h = jnp.tanh(h @ wh[i].T + bh[i])    # hidden layers with tanh
    return h @ wp.T + bp                     # predict


if __name__ == "__main__":
    key = jax.random.PRNGKey(0)
    k_x, k_p, k_x2 = jax.random.split(key, 3)

    n_hidden_layers = 2
    n_neurons_per_layer = 32
    params = init_params(k_p, n_hidden_layers, n_neurons_per_layer)

    # Small case (torch layout): whole batch handled in one lane-aligned tile.
    x_small = jax.random.normal(k_x, (16, 2), jnp.float32)
    out_small = jax.block_until_ready(approximation_net_forward(x_small, params))
    ref_small = reference_forward(x_small, params)
    assert out_small.shape == (16, 1)
    assert jnp.allclose(out_small, ref_small, atol=1e-4, rtol=1e-4), (
        f"max abs err {jnp.max(jnp.abs(out_small - ref_small))}"
    )

    # Larger case, fed features-major so no host transpose/pad pass is needed; a small
    # batch_tile is forced here only to exercise a multi-tile (parallel) grid — real
    # workloads should keep the large default tile.
    x_big_t = jax.random.normal(k_x2, (2, 1024), jnp.float32)    # (2, B) features-major
    out_big = jax.block_until_ready(
        approximation_net_forward_features_major(x_big_t, params, batch_tile=256)
    )
    ref_big = reference_forward(x_big_t.T, params)
    assert out_big.shape == (1024, 1)
    assert jnp.allclose(out_big, ref_big, atol=1e-4, rtol=1e-4), (
        f"max abs err {jnp.max(jnp.abs(out_big - ref_big))}"
    )

    print("KERNEL_OK")
</pallas_src>

<mosaic_0001>
module attributes {stable_mosaic.version = 11 : i64} {
  func.func @mlp_kernel(%arg0: i32, %arg1: memref<2x128xf32, #tpu.memory_space<vmem>>, %arg2: memref<32x2xf32, #tpu.memory_space<vmem>>, %arg3: memref<32x1xf32, #tpu.memory_space<vmem>>, %arg4: memref<2x32x32xf32, #tpu.memory_space<vmem>>, %arg5: memref<2x32x1xf32, #tpu.memory_space<vmem>>, %arg6: memref<32x1xf32, #tpu.memory_space<vmem>>, %arg7: memref<1x1xf32, #tpu.memory_space<vmem>>, %arg8: memref<1x128xf32, #tpu.memory_space<vmem>>) attributes {dimension_semantics = [#tpu.dimension_semantics<parallel>], iteration_bounds = array<i64: 1>, scalar_prefetch = 0 : i64, scratch_operands = 0 : i64, tpu.core_type = #tpu.core_type<tc>, window_params = [{transform_indices = @transform_0, window_bounds = array<i64: 2, 128>}, {pipeline_mode = #tpu.pipeline_mode<synchronous>, transform_indices = @transform_1, window_bounds = array<i64: 32, 2>}, {pipeline_mode = #tpu.pipeline_mode<synchronous>, transform_indices = @transform_2, window_bounds = array<i64: 32, 1>}, {pipeline_mode = #tpu.pipeline_mode<synchronous>, transform_indices = @transform_3, window_bounds = array<i64: 2, 32, 32>}, {pipeline_mode = #tpu.pipeline_mode<synchronous>, transform_indices = @transform_4, window_bounds = array<i64: 2, 32, 1>}, {pipeline_mode = #tpu.pipeline_mode<synchronous>, transform_indices = @transform_5, window_bounds = array<i64: 32, 1>}, {pipeline_mode = #tpu.pipeline_mode<synchronous>, transform_indices = @transform_6, window_bounds = array<i64: 1, 1>}, {transform_indices = @transform_7, window_bounds = array<i64: 1, 128>}]} {
    %c0 = arith.constant 0 : index
    %c0_0 = arith.constant 0 : index
    %0 = vector.load %arg1[%c0, %c0_0] : memref<2x128xf32, #tpu.memory_space<vmem>>, vector<2x128xf32>
    %c0_1 = arith.constant 0 : index
    %c0_2 = arith.constant 0 : index
    %1 = vector.load %arg2[%c0_1, %c0_2] : memref<32x2xf32, #tpu.memory_space<vmem>>, vector<32x2xf32>
    %2 = vector.extract_strided_slice %1 {offsets = [0, 0], sizes = [32, 1], strides = [1, 1]} : vector<32x2xf32> to vector<32x1xf32>
    %3 = vector.extract_strided_slice %0 {offsets = [0, 0], sizes = [1, 128], strides = [1, 1]} : vector<2x128xf32> to vector<1x128xf32>
    %4 = vector.broadcast %2 : vector<32x1xf32> to vector<32x128xf32>
    %5 = vector.broadcast %3 : vector<1x128xf32> to vector<32x128xf32>
    %6 = arith.mulf %4, %5 : vector<32x128xf32>
    %7 = vector.extract_strided_slice %1 {offsets = [0, 1], sizes = [32, 1], strides = [1, 1]} : vector<32x2xf32> to vector<32x1xf32>
    %8 = vector.extract_strided_slice %0 {offsets = [1, 0], sizes = [1, 128], strides = [1, 1]} : vector<2x128xf32> to vector<1x128xf32>
    %9 = vector.broadcast %7 : vector<32x1xf32> to vector<32x128xf32>
    %10 = vector.broadcast %8 : vector<1x128xf32> to vector<32x128xf32>
    %11 = arith.mulf %9, %10 : vector<32x128xf32>
    %12 = arith.addf %6, %11 : vector<32x128xf32>
    %c0_3 = arith.constant 0 : index
    %c0_4 = arith.constant 0 : index
    %13 = vector.load %arg3[%c0_3, %c0_4] : memref<32x1xf32, #tpu.memory_space<vmem>>, vector<32x1xf32>
    %14 = vector.broadcast %13 : vector<32x1xf32> to vector<32x128xf32>
    %15 = arith.addf %12, %14 : vector<32x128xf32>
    %c0_5 = arith.constant 0 : index
    %c0_6 = arith.constant 0 : index
    %c0_7 = arith.constant 0 : index
    %16 = vector.load %arg4[%c0_5, %c0_6, %c0_7] : memref<2x32x32xf32, #tpu.memory_space<vmem>>, vector<1x32x32xf32>
    %17 = vector.shape_cast %16 : vector<1x32x32xf32> to vector<32x32xf32>
    %cst = arith.constant dense<0.000000e+00> : vector<32x128xf32>
    %18 = tpu.matmul %17, %15, %cst {dimension_numbers = #tpu.dot_dimension_numbers<[1], [0], [0], [1], [0, 0, 1, 1], [], []>} : vector<32x32xf32>, vector<32x128xf32>, vector<32x128xf32> -> vector<32x128xf32>
    %c0_8 = arith.constant 0 : index
    %c0_9 = arith.constant 0 : index
    %c0_10 = arith.constant 0 : index
    %19 = vector.load %arg5[%c0_8, %c0_9, %c0_10] : memref<2x32x1xf32, #tpu.memory_space<vmem>>, vector<1x32x1xf32>
    %20 = vector.shape_cast %19 : vector<1x32x1xf32> to vector<32x1xf32>
    %21 = vector.broadcast %20 : vector<32x1xf32> to vector<32x128xf32>
    %22 = arith.addf %18, %21 : vector<32x128xf32>
    %23 = math.tanh %22 : vector<32x128xf32>
    %c1 = arith.constant 1 : index
    %c0_11 = arith.constant 0 : index
    %c0_12 = arith.constant 0 : index
    %24 = vector.load %arg4[%c1, %c0_11, %c0_12] : memref<2x32x32xf32, #tpu.memory_space<vmem>>, vector<1x32x32xf32>
    %25 = vector.shape_cast %24 : vector<1x32x32xf32> to vector<32x32xf32>
    %cst_13 = arith.constant dense<0.000000e+00> : vector<32x128xf32>
    %26 = tpu.matmul %25, %23, %cst_13 {dimension_numbers = #tpu.dot_dimension_numbers<[1], [0], [0], [1], [0, 0, 1, 1], [], []>} : vector<32x32xf32>, vector<32x128xf32>, vector<32x128xf32> -> vector<32x128xf32>
    %c1_14 = arith.constant 1 : index
    %c0_15 = arith.constant 0 : index
    %c0_16 = arith.constant 0 : index
    %27 = vector.load %arg5[%c1_14, %c0_15, %c0_16] : memref<2x32x1xf32, #tpu.memory_space<vmem>>, vector<1x32x1xf32>
    %28 = vector.shape_cast %27 : vector<1x32x1xf32> to vector<32x1xf32>
    %29 = vector.broadcast %28 : vector<32x1xf32> to vector<32x128xf32>
    %30 = arith.addf %26, %29 : vector<32x128xf32>
    %31 = math.tanh %30 : vector<32x128xf32>
    %c0_17 = arith.constant 0 : index
    %c0_18 = arith.constant 0 : index
    %32 = vector.load %arg6[%c0_17, %c0_18] : memref<32x1xf32, #tpu.memory_space<vmem>>, vector<32x1xf32>
    %33 = vector.broadcast %32 : vector<32x1xf32> to vector<32x128xf32>
    %34 = arith.mulf %31, %33 : vector<32x128xf32>
    %cst_19 = arith.constant dense<0.000000e+00> : vector<128xf32>
    %35 = vector.multi_reduction <add>, %34, %cst_19 [0] : vector<32x128xf32> to vector<128xf32>
    %36 = vector.shape_cast %35 : vector<128xf32> to vector<1x128xf32>
    %c0_20 = arith.constant 0 : index
    %c0_21 = arith.constant 0 : index
    %37 = vector.load %arg7[%c0_20, %c0_21] : memref<1x1xf32, #tpu.memory_space<vmem>>, vector<1x1xf32>
    %38 = vector.broadcast %37 : vector<1x1xf32> to vector<1x128xf32>
    %39 = arith.addf %36, %38 : vector<1x128xf32>
    %c0_22 = arith.constant 0 : index
    %c0_23 = arith.constant 0 : index
    %40 = vector.load %arg8[%c0_22, %c0_23] : memref<1x128xf32, #tpu.memory_space<vmem>>, vector<1x128xf32>
    tpu.vector_store %arg8[%c0_22, %c0_23], %39 {strides = array<i32>} : memref<1x128xf32, #tpu.memory_space<vmem>>, vector<1x128xf32>,
    return
  }
  func.func @transform_0(%arg0: i32) -> (i32, i32) {
    %c0_i32 = arith.constant 0 : i32
    %c0_i32_0 = arith.constant 0 : i32
    return %c0_i32, %arg0 : i32, i32
  }
  func.func @transform_1(%arg0: i32) -> (i32, i32) {
    %c0_i32 = arith.constant 0 : i32
    %c0_i32_0 = arith.constant 0 : i32
    %c0_i32_1 = arith.constant 0 : i32
    return %c0_i32, %c0_i32_0 : i32, i32
  }
  func.func @transform_2(%arg0: i32) -> (i32, i32) {
    %c0_i32 = arith.constant 0 : i32
    %c0_i32_0 = arith.constant 0 : i32
    %c0_i32_1 = arith.constant 0 : i32
    return %c0_i32, %c0_i32_0 : i32, i32
  }
  func.func @transform_3(%arg0: i32) -> (i32, i32, i32) {
    %c0_i32 = arith.constant 0 : i32
    %c0_i32_0 = arith.constant 0 : i32
    %c0_i32_1 = arith.constant 0 : i32
    %c0_i32_2 = arith.constant 0 : i32
    return %c0_i32, %c0_i32_0, %c0_i32_1 : i32, i32, i32
  }
  func.func @transform_4(%arg0: i32) -> (i32, i32, i32) {
    %c0_i32 = arith.constant 0 : i32
    %c0_i32_0 = arith.constant 0 : i32
    %c0_i32_1 = arith.constant 0 : i32
    %c0_i32_2 = arith.constant 0 : i32
    return %c0_i32, %c0_i32_0, %c0_i32_1 : i32, i32, i32
  }
  func.func @transform_5(%arg0: i32) -> (i32, i32) {
    %c0_i32 = arith.constant 0 : i32
    %c0_i32_0 = arith.constant 0 : i32
    %c0_i32_1 = arith.constant 0 : i32
    return %c0_i32, %c0_i32_0 : i32, i32
  }
  func.func @transform_6(%arg0: i32) -> (i32, i32) {
    %c0_i32 = arith.constant 0 : i32
    %c0_i32_0 = arith.constant 0 : i32
    %c0_i32_1 = arith.constant 0 : i32
    return %c0_i32, %c0_i32_0 : i32, i32
  }
  func.func @transform_7(%arg0: i32) -> (i32, i32) {
    %c0_i32 = arith.constant 0 : i32
    %c0_i32_0 = arith.constant 0 : i32
    return %c0_i32, %arg0 : i32, i32
  }
}

</mosaic_0001>

<llo_original>
// kernel: tpu_custom_call.1
$region0: #{tpu_custom_call.1}
  #allocation0 [shape = 'u32[]', space=smem, size = 0x4, offset = 0x4, fixed_abs, tag = 'smem constant byte address 0x4 - core index']
  #allocation1 [shape = 'u32[144,128]{1,0:T(1,128)}', space=vmem, size = 0x12000, scoped, tag = 'internal scratch']
  #allocation2 [shape = 'f32[1,1]{1,0:T(1,128)S(1)}', space=vmem, size = 0x200, scoped, tag = 'scoped memory for tpu_custom_call.1']
  %s0 = inlined_call_operand.vmem [shape: f32[2,128], index: 0, kind: input, shape index: {}]
  %s1 = inlined_call_operand.vmem [shape: f32[32,2], index: 1, kind: input, shape index: {}]
  %s2 = inlined_call_operand.vmem [shape: f32[32,1], index: 2, kind: input, shape index: {}]
  %s3 = inlined_call_operand.vmem [shape: f32[2,32,32], index: 3, kind: input, shape index: {}]
  %s4 = inlined_call_operand.vmem [shape: f32[2,32,1], index: 4, kind: input, shape index: {}]
  %s5 = inlined_call_operand.vmem [shape: f32[32,1], index: 5, kind: input, shape index: {}]
  %s6 = inlined_call_operand.<no memory space> [shape: f32[1,1], index: 6, kind: input, shape index: {}]
  %s7 = inlined_call_operand.hbm [shape: f32[1,128], index: 7, kind: output, shape index: {}]
  %s8 = sld [smem:[#allocation0]]
  $region38: #{tpu_custom_call.1} parent=0
    _
  %s10 = ssub.s32 1, %s8
  %s11 = scalar_select 0, %s10, %s8
  %v12 = vstv %s6
  %13 = vst [vmem:[#allocation2] sm:$0x1] %v12
  $region1: #{tpu_custom_call.1} parent=0
    #allocation3 [shape = 'u8[512]{0}', space=vmem, size = 0x400, scoped, tag = 'output window, operand 0, single buffered']
    #allocation4 [shape = 's32[1]{0}', space=sflag, size = 0x4, scoped, tag = 'scoped memory for tpu_custom_call.1']
    %14 = vsyncpa [#allocation4], 0
    // Predicated region
    $region2: #{tpu_custom_call.1} parent=1 // pred_check
      _
    $region3: #{tpu_custom_call.1} parent=1 // pred_check_branch
      %16 = sbr.rel (0) target = $region5
    $region4: #{tpu_custom_call.1} parent=1 // pred_region
      _
    $region5: #{tpu_custom_call.1} parent=1 // pred_fallthru
      _
    // Predicated region
    $region6: #{tpu_custom_call.1} parent=1 // pred_check
      _
    $region7: #{tpu_custom_call.1} parent=1 // pred_check_branch
      %18 = sbr.rel (0) target = $region9
    $region8: #{tpu_custom_call.1} parent=1 // pred_region
      _
    $region9: #{tpu_custom_call.1} parent=1 // pred_fallthru
      _
    // Predicated region
    $region10: #{tpu_custom_call.1} parent=1 // pred_check
      _
    $region11: #{tpu_custom_call.1} parent=1 // pred_check_branch
      %20 = sbr.rel (0) target = $region13
    $region12: #{tpu_custom_call.1} parent=1 // pred_region
      _
    $region13: #{tpu_custom_call.1} parent=1 // pred_fallthru
      _
    // Predicated region
    $region14: #{tpu_custom_call.1} parent=1 // pred_check
      _
    $region15: #{tpu_custom_call.1} parent=1 // pred_check_branch
      %22 = sbr.rel (0) target = $region17
    $region16: #{tpu_custom_call.1} parent=1 // pred_region
      _
    $region17: #{tpu_custom_call.1} parent=1 // pred_fallthru
      _
    // Predicated region
    $region18: #{tpu_custom_call.1} parent=1 // pred_check
      _
    $region19: #{tpu_custom_call.1} parent=1 // pred_check_branch
      %24 = sbr.rel (0) target = $region21
    $region20: #{tpu_custom_call.1} parent=1 // pred_region
      _
    $region21: #{tpu_custom_call.1} parent=1 // pred_fallthru
      _
    // Predicated region
    $region22: #{tpu_custom_call.1} parent=1 // pred_check
      _
    $region23: #{tpu_custom_call.1} parent=1 // pred_check_branch
      %26 = sbr.rel (0) target = $region25
    $region24: #{tpu_custom_call.1} parent=1 // pred_region
      _
    $region25: #{tpu_custom_call.1} parent=1 // pred_fallthru
      _
    // Predicated region
    $region26: #{tpu_custom_call.1} parent=1 // pred_check
      _
    $region27: #{tpu_custom_call.1} parent=1 // pred_check_branch
      %28 = sbr.rel (0) target = $region29
    $region28: #{tpu_custom_call.1} parent=1 // pred_region
      _
    $region29: #{tpu_custom_call.1} parent=1 // pred_fallthru
      _
    %v29 = vld [vmem:[%s0] sm:$0x3]
    %v30 = vld [vmem:[%s1] sm:$0xff]
    %v31 = vld [vmem:[%s1 + $0x8] sm:$0xff]
    %v32 = vld [vmem:[%s1 + $0x10] sm:$0xff]
    %v33 = vld [vmem:[%s1 + $0x18] sm:$0xff]
    %35 = vset.pattern.permute.xlu0 0
    %36 = vperm.xlu0 %35, %v30
    %v37 = vpop.permute.xlu0 %36
    %40 = vset.pattern.permute.xlu0 0
    %41 = vperm.xlu0 %40, %v31
    %v42 = vpop.permute.xlu0 %41
    %45 = vset.pattern.permute.xlu0 0
    %46 = vperm.xlu0 %45, %v32
    %v47 = vpop.permute.xlu0 %46
    %50 = vset.pattern.permute.xlu0 0
    %51 = vperm.xlu0 %50, %v33
    %v52 = vpop.permute.xlu0 %51
    %v54 = vlaneseq
    %v55 = vshrl.u32 %v54, 7
    %v56 = vsub.s32 0, %v55
    %v57 = vrot.slane %v29, %v56
    %v58 = vmul.f32 %v37, %v57
    %v59 = vmul.f32 %v42, %v57
    %v60 = vmul.f32 %v47, %v57
    %v61 = vmul.f32 %v52, %v57
    %62 = vset.pattern.permute.xlu0 1
    %63 = vperm.xlu0 %62, %v30
    %v64 = vpop.permute.xlu0 %63
    %66 = vset.pattern.permute.xlu0 1
    %67 = vperm.xlu0 %66, %v31
    %v68 = vpop.permute.xlu0 %67
    %70 = vset.pattern.permute.xlu0 1
    %71 = vperm.xlu0 %70, %v32
    %v72 = vpop.permute.xlu0 %71
    %74 = vset.pattern.permute.xlu0 1
    %75 = vperm.xlu0 %74, %v33
    %v76 = vpop.permute.xlu0 %75
    %v78 = vlaneseq
    %v79 = vshrl.u32 %v78, 7
    %v80 = vsub.s32 1, %v79
    %v81 = vrot.slane %v29, %v80
    %v82 = vmul.f32 %v64, %v81
    %v83 = vmul.f32 %v68, %v81
    %v84 = vmul.f32 %v72, %v81
    %v85 = vmul.f32 %v76, %v81
    %v86 = vadd.f32 %v58, %v82
    %v87 = vadd.f32 %v59, %v83
    %v88 = vadd.f32 %v60, %v84
    %v89 = vadd.f32 %v61, %v85
    %v90 = vld [vmem:[%s2] sm:$0xff]
    %v91 = vld [vmem:[%s2 + $0x8] sm:$0xff]
    %v92 = vld [vmem:[%s2 + $0x10] sm:$0xff]
    %v93 = vld [vmem:[%s2 + $0x18] sm:$0xff]
    %95 = vset.pattern.permute.xlu0 0
    %96 = vperm.xlu0 %95, %v90
    %v97 = vpop.permute.xlu0 %96
    %100 = vset.pattern.permute.xlu0 0
    %101 = vperm.xlu0 %100, %v91
    %v102 = vpop.permute.xlu0 %101
    %105 = vset.pattern.permute.xlu0 0
    %106 = vperm.xlu0 %105, %v92
    %v107 = vpop.permute.xlu0 %106
    %110 = vset.pattern.permute.xlu0 0
    %111 = vperm.xlu0 %110, %v93
    %v112 = vpop.permute.xlu0 %111
    %v114 = vadd.f32 %v86, %v97
    %v115 = vadd.f32 %v87, %v102
    %v116 = vadd.f32 %v88, %v107
    %v117 = vadd.f32 %v89, %v112
    %v118 = vld [vmem:[%s3] sm:$0xff]
    %v119 = vld [vmem:[%s3 + $0x8] sm:$0xff]
    %v120 = vld [vmem:[%s3 + $0x10] sm:$0xff]
    %v121 = vld [vmem:[%s3 + $0x18] sm:$0xff]
    %v122 = vld [vmem:[%s4] sm:$0xff]
    %v123 = vld [vmem:[%s4 + $0x8] sm:$0xff]
    %v124 = vld [vmem:[%s4 + $0x10] sm:$0xff]
    %v125 = vld [vmem:[%s4 + $0x18] sm:$0xff]
    %127 = vset.pattern.permute.xlu0 0
    %128 = vperm.xlu0 %127, %v122
    %v129 = vpop.permute.xlu0 %128
    %132 = vset.pattern.permute.xlu0 0
    %133 = vperm.xlu0 %132, %v123
    %v134 = vpop.permute.xlu0 %133
    %137 = vset.pattern.permute.xlu0 0
    %138 = vperm.xlu0 %137, %v124
    %v139 = vpop.permute.xlu0 %138
    %142 = vset.pattern.permute.xlu0 0
    %143 = vperm.xlu0 %142, %v125
    %v144 = vpop.permute.xlu0 %143
    %vm146 = vcmask 261120
    %v148 = vsel %vm146, %v118, 0
    %v151 = vsel %vm146, %v119, 0
    %v154 = vsel %vm146, %v120, 0
    %v157 = vsel %vm146, %v121, 0
    %159 = vmatprep.subr.mxu0 0.0
    %160 = vmatpush1.msra.mxu0 0.0
    %161 = vmatprep.subr.mxu0 0.0
    %162 = vmatpush1.msra.mxu0 0.0
    %163 = vmatprep.subr.mxu0 0.0
    %164 = vmatpush1.msra.mxu0 0.0
    %165 = vmatprep.subr.mxu0 0.0
    %166 = vmatpush1.msra.mxu0 0.0
    %167 = vmatprep.subr.mxu0 0.0
    %168 = vmatpush1.msra.mxu0 0.0
    %169 = vmatprep.subr.mxu0 0.0
    %170 = vmatpush1.msra.mxu0 0.0
    %171 = vmatprep.subr.mxu0 0.0
    %172 = vmatpush1.msra.mxu0 0.0
    %173 = vmatprep.subr.mxu0 0.0
    %174 = vmatpush1.msra.mxu0 0.0
    %175 = vmatprep.subr.mxu0 0.0
    %176 = vmatpush1.msra.mxu0 0.0
    %177 = vmatprep.subr.mxu0 0.0
    %178 = vmatpush1.msra.mxu0 0.0
    %179 = vmatprep.subr.mxu0 0.0
    %180 = vmatpush1.msra.mxu0 0.0
    %181 = vmatprep.subr.mxu0 0.0
    %182 = vmatpush1.msra.mxu0 0.0
    %183 = vmatprep.subr.mxu0 0.0
    %184 = vmatpush1.msra.mxu0 %v117
    %185 = vmatprep.subr.mxu0 0.0
    %186 = vmatpush1.msra.mxu0 %v116
    %187 = vmatprep.subr.mxu0 0.0
    %188 = vmatpush1.msra.mxu0 %v115
    %189 = vmatprep.subr.mxu0 0.0
    %190 = vmatpush1.msra.mxu0 %v114
    %191 = vmatprep.subr.mxu0 0.0
    %192 = vmatpush2.msra.mxu0 0.0
    %193 = vmatprep.subr.mxu0 0.0
    %194 = vmatpush2.msra.mxu0 0.0
    %195 = vmatprep.subr.mxu0 0.0
    %196 = vmatpush2.msra.mxu0 0.0
    %197 = vmatprep.subr.mxu0 0.0
    %198 = vmatpush2.msra.mxu0 0.0
    %199 = vmatprep.subr.mxu0 0.0
    %200 = vmatpush2.msra.mxu0 0.0
    %201 = vmatprep.subr.mxu0 0.0
    %202 = vmatpush2.msra.mxu0 0.0
    %203 = vmatprep.subr.mxu0 0.0
    %204 = vmatpush2.msra.mxu0 0.0
    %205 = vmatprep.subr.mxu0 0.0
    %206 = vmatpush2.msra.mxu0 0.0
    %207 = vmatprep.subr.mxu0 0.0
    %208 = vmatpush2.msra.mxu0 0.0
    %209 = vmatprep.subr.mxu0 0.0
    %210 = vmatpush2.msra.mxu0 0.0
    %211 = vmatprep.subr.mxu0 0.0
    %212 = vmatpush2.msra.mxu0 0.0
    %213 = vmatprep.subr.mxu0 0.0
    %214 = vmatpush2.msra.mxu0 0.0
    %215 = vmatprep.subr.mxu0 0.0
    %216 = vmatpush2.msra.mxu0 0.0
    %217 = vmatprep.subr.mxu0 0.0
    %218 = vmatpush2.msra.mxu0 0.0
    %219 = vmatprep.subr.mxu0 0.0
    %220 = vmatpush2.msra.mxu0 0.0
    %221 = vmatprep.subr.mxu0 0.0
    %222 = vmatpush2.msra.mxu0 0.0
    %223 = vmatprep.mubr.f32.mxu0 0.0
    %224 = vmatmul.mubr.f32.gmra.mxu0 %v148
    %v225 = vpop.f32.mrf.mxu0
    %v226 = vadd.f32 %v129, %v225
    %v227 = vpop.f32.mrf.mxu0
    %228 = vmatprep.mubr.f32.mxu0 0.0
    %229 = vmatmul.mubr.f32.gmra.mxu0 %v151
    %v230 = vpop.f32.mrf.mxu0
    %v231 = vadd.f32 %v134, %v230
    %v232 = vpop.f32.mrf.mxu0
    %233 = vmatprep.mubr.f32.mxu0 0.0
    %234 = vmatmul.mubr.f32.gmra.mxu0 %v154
    %v235 = vpop.f32.mrf.mxu0
    %v236 = vadd.f32 %v139, %v235
    %v237 = vpop.f32.mrf.mxu0
    %238 = vmatprep.mubr.f32.mxu0 0.0
    %239 = vmatmul.mubr.f32.gmra.mxu0 %v157
    %v240 = vpop.f32.mrf.mxu0
    %v241 = vadd.f32 %v144, %v240
    %v242 = vpop.f32.mrf.mxu0
    %243 = vdwg.mxu0
    %v244 = vtanh.pop %v226
    %v245 = vtanh.pop %v231
    %v246 = vtanh.pop %v236
    %v247 = vtanh.pop %v241
    %s248 = scalar_lea.vmem %s3, 32
    %v249 = vld [vmem:[%s248] sm:$0xff]
    %v250 = vld [vmem:[%s248 + $0x8] sm:$0xff]
    %v251 = vld [vmem:[%s248 + $0x10] sm:$0xff]
    %v252 = vld [vmem:[%s248 + $0x18] sm:$0xff]
    %s253 = scalar_lea.vmem %s4, 32
    %v254 = vld [vmem:[%s253] sm:$0xff]
    %v255 = vld [vmem:[%s253 + $0x8] sm:$0xff]
    %v256 = vld [vmem:[%s253 + $0x10] sm:$0xff]
    %v257 = vld [vmem:[%s253 + $0x18] sm:$0xff]
    %259 = vset.pattern.permute.xlu0 0
    %260 = vperm.xlu0 %259, %v254
    %v261 = vpop.permute.xlu0 %260
    %264 = vset.pattern.permute.xlu0 0
    %265 = vperm.xlu0 %264, %v255
    %v266 = vpop.permute.xlu0 %265
    %269 = vset.pattern.permute.xlu0 0
    %270 = vperm.xlu0 %269, %v256
    %v271 = vpop.permute.xlu0 %270
    %274 = vset.pattern.permute.xlu0 0
    %275 = vperm.xlu0 %274, %v257
    %v276 = vpop.permute.xlu0 %275
    %v279 = vsel %vm146, %v249, 0
    %v282 = vsel %vm146, %v250, 0
    %v285 = vsel %vm146, %v251, 0
    %v288 = vsel %vm146, %v252, 0
    %290 = vmatprep.subr.mxu0 0.0
    %291 = vmatpush1.msra.mxu0 0.0
    %292 = vmatprep.subr.mxu0 0.0
    %293 = vmatpush1.msra.mxu0 0.0
    %294 = vmatprep.subr.mxu0 0.0
    %295 = vmatpush1.msra.mxu0 0.0
    %296 = vmatprep.subr.mxu0 0.0
    %297 = vmatpush1.msra.mxu0 0.0
    %298 = vmatprep.subr.mxu0 0.0
    %299 = vmatpush1.msra.mxu0 0.0
    %300 = vmatprep.subr.mxu0 0.0
    %301 = vmatpush1.msra.mxu0 0.0
    %302 = vmatprep.subr.mxu0 0.0
    %303 = vmatpush1.msra.mxu0 0.0
    %304 = vmatprep.subr.mxu0 0.0
    %305 = vmatpush1.msra.mxu0 0.0
    %306 = vmatprep.subr.mxu0 0.0
    %307 = vmatpush1.msra.mxu0 0.0
    %308 = vmatprep.subr.mxu0 0.0
    %309 = vmatpush1.msra.mxu0 0.0
    %310 = vmatprep.subr.mxu0 0.0
    %311 = vmatpush1.msra.mxu0 0.0
    %312 = vmatprep.subr.mxu0 0.0
    %313 = vmatpush1.msra.mxu0 0.0
    %314 = vmatprep.subr.mxu0 0.0
    %315 = vmatpush1.msra.mxu0 %v247
    %316 = vmatprep.subr.mxu0 0.0
    %317 = vmatpush1.msra.mxu0 %v246
    %318 = vmatprep.subr.mxu0 0.0
    %319 = vmatpush1.msra.mxu0 %v245
    %320 = vmatprep.subr.mxu0 0.0
    %321 = vmatpush1.msra.mxu0 %v244
    %322 = vmatprep.subr.mxu0 0.0
    %323 = vmatpush2.msra.mxu0 0.0
    %324 = vmatprep.subr.mxu0 0.0
    %325 = vmatpush2.msra.mxu0 0.0
    %326 = vmatprep.subr.mxu0 0.0
    %327 = vmatpush2.msra.mxu0 0.0
    %328 = vmatprep.subr.mxu0 0.0
    %329 = vmatpush2.msra.mxu0 0.0
    %330 = vmatprep.subr.mxu0 0.0
    %331 = vmatpush2.msra.mxu0 0.0
    %332 = vmatprep.subr.mxu0 0.0
    %333 = vmatpush2.msra.mxu0 0.0
    %334 = vmatprep.subr.mxu0 0.0
    %335 = vmatpush2.msra.mxu0 0.0
    %336 = vmatprep.subr.mxu0 0.0
    %337 = vmatpush2.msra.mxu0 0.0
    %338 = vmatprep.subr.mxu0 0.0
    %339 = vmatpush2.msra.mxu0 0.0
    %340 = vmatprep.subr.mxu0 0.0
    %341 = vmatpush2.msra.mxu0 0.0
    %342 = vmatprep.subr.mxu0 0.0
    %343 = vmatpush2.msra.mxu0 0.0
    %344 = vmatprep.subr.mxu0 0.0
    %345 = vmatpush2.msra.mxu0 0.0
    %346 = vmatprep.subr.mxu0 0.0
    %347 = vmatpush2.msra.mxu0 0.0
    %348 = vmatprep.subr.mxu0 0.0
    %349 = vmatpush2.msra.mxu0 0.0
    %350 = vmatprep.subr.mxu0 0.0
    %351 = vmatpush2.msra.mxu0 0.0
    %352 = vmatprep.subr.mxu0 0.0
    %353 = vmatpush2.msra.mxu0 0.0
    %354 = vmatprep.mubr.f32.mxu0 0.0
    %355 = vmatmul.mubr.f32.gmra.mxu0 %v279
    %v356 = vpop.f32.mrf.mxu0
    %v357 = vadd.f32 %v261, %v356
    %v358 = vpop.f32.mrf.mxu0
    %359 = vmatprep.mubr.f32.mxu0 0.0
    %360 = vmatmul.mubr.f32.gmra.mxu0 %v282
    %v361 = vpop.f32.mrf.mxu0
    %v362 = vadd.f32 %v266, %v361
    %v363 = vpop.f32.mrf.mxu0
    %364 = vmatprep.mubr.f32.mxu0 0.0
    %365 = vmatmul.mubr.f32.gmra.mxu0 %v285
    %v366 = vpop.f32.mrf.mxu0
    %v367 = vadd.f32 %v271, %v366
    %v368 = vpop.f32.mrf.mxu0
    %369 = vmatprep.mubr.f32.mxu0 0.0
    %370 = vmatmul.mubr.f32.gmra.mxu0 %v288
    %v371 = vpop.f32.mrf.mxu0
    %v372 = vadd.f32 %v276, %v371
    %v373 = vpop.f32.mrf.mxu0
    %374 = vdwg.mxu0
    %v375 = vtanh.pop %v357
    %v376 = vtanh.pop %v362
    %v377 = vtanh.pop %v367
    %v378 = vtanh.pop %v372
    %v379 = vld [vmem:[%s5] sm:$0xff]
    %v380 = vld [vmem:[%s5 + $0x8] sm:$0xff]
    %v381 = vld [vmem:[%s5 + $0x10] sm:$0xff]
    %v382 = vld [vmem:[%s5 + $0x18] sm:$0xff]
    %384 = vset.pattern.permute.xlu0 0
    %385 = vperm.xlu0 %384, %v379
    %v386 = vpop.permute.xlu0 %385
    %389 = vset.pattern.permute.xlu0 0
    %390 = vperm.xlu0 %389, %v380
    %v391 = vpop.permute.xlu0 %390
    %394 = vset.pattern.permute.xlu0 0
    %395 = vperm.xlu0 %394, %v381
    %v396 = vpop.permute.xlu0 %395
    %399 = vset.pattern.permute.xlu0 0
    %400 = vperm.xlu0 %399, %v382
    %v401 = vpop.permute.xlu0 %400
    %v403 = vmul.f32 %v375, %v386
    %v404 = vmul.f32 %v376, %v391
    %v405 = vmul.f32 %v377, %v396
    %v406 = vmul.f32 %v378, %v401
    %v407 = vadd.f32 %v403, %v404
    %v408 = vadd.f32 %v407, %v405
    %v409 = vadd.f32 %v408, %v406
    %v410 = vrot.slane %v409, 4
    %v411 = vadd.f32 %v409, %v410
    %v412 = vrot.slane %v411, 2
    %v413 = vadd.f32 %v411, %v412
    %v414 = vrot.slane %v413, 1
    %v415 = vadd.f32 %v413, %v414
    %v416 = vld [vmem:[#allocation2] sm:$0x1]
    %418 = vset.pattern.permute.xlu0 0
    %419 = vperm.xlu0 %418, %v416
    %v420 = vpop.permute.xlu0 %419
    %v422 = vlaneseq
    %v423 = vshrl.u32 %v422, 7
    %v424 = vsub.s32 0, %v423
    %v425 = vrot.slane %v420, %v424
    %v426 = vadd.f32 %v415, %v425
    %427 = vst [vmem:[#allocation3] sm:$0x1] %v426
    // Predicated region
    $region30: #{tpu_custom_call.1} parent=1 // pred_check
      _
    $region31: #{tpu_custom_call.1} parent=1 // pred_check_branch
      %429 = sbr.rel (0) target = $region33
    $region32: #{tpu_custom_call.1} parent=1 // pred_region
      %s431 = ssub.s32 16, 16
      %432 = vsyncadd [#allocation4], %s431
      %s434 = sshll.u32 [#allocation3], 4
      %s435 = int_to_ptr.vmem [resolvable:$true] %s434
      %437 = dma.vmem_to_hbm [thread:$0]  %s435, 16, %s7, [#allocation4]
    $region33: #{tpu_custom_call.1} parent=1 // pred_fallthru
      _
    // Predicated region
    $region34: #{tpu_custom_call.1} parent=1 // pred_check
      _
    $region35: #{tpu_custom_call.1} parent=1 // pred_check_branch
      %439 = sbr.rel (0) target = $region37
    $region36: #{tpu_custom_call.1} parent=1 // pred_region
      %440 = dma.done [#allocation4], 16
    $region37: #{tpu_custom_call.1} parent=1 // pred_fallthru
      _
    %441 = vsyncpa [#allocation4], 1

</llo_original>
